<compile_context>
chip_gen: v6e
topology: v6e:2x2x1
jax: 0.10.0
libtpu: 0.0.40
codegen_flags: <defaults>
</compile_context>

<pallas_src>
import functools

import jax
import jax.numpy as jnp
from jax.experimental import pallas as pl
from jax.experimental.pallas import tpu as pltpu


def attention_kernel(feat_ref, hid_ref, wf_ref, wh_ref, bh_ref, wc_ref, bc_ref,
                     expand_ref, bdmask_ref, ctx_ref, alpha_ref,
                     *, n_valid, tanh_dtype=None):
    bt, n_pad, e_dim = feat_ref.shape
    a_dim = wf_ref.shape[1]

    feat3 = feat_ref[...]                                   # (Bt, Np, E)
    # Collapse leading dims only (Np is a multiple of the sublane pack -> free).
    feat2 = feat3.reshape(bt * n_pad, e_dim)                # (Bt*Np, E)

    # features_fc over all Bt*Np rows in a single MXU matmul, f32 accumulation.
    # (Its bias is folded into bh_ref in the wrapper.)
    a2 = jnp.dot(feat2, wf_ref[...],
                 preferred_element_type=jnp.float32)        # (Bt*Np, A)

    # hidden_fc with combined bias (b_hidden + b_features): (Bt, D) @ (D, A).
    h = jnp.dot(hid_ref[...], wh_ref[...],
                preferred_element_type=jnp.float32) + bh_ref[...]       # (Bt, A)

    # Broadcast h over the Np positions of its batch element with the precomputed
    # one-hot matmul (hoisted out of the per-step body; row b*Np+j selects h[b]).
    h_big = jnp.dot(expand_ref[...], h,
                    preferred_element_type=jnp.float32)     # (Bt*Np, A)

    # e_t = tanh(a + h_t). Optionally run tanh in bf16 (v6e/v7x EUP); add stays f32.
    pre = a2 + h_big
    if tanh_dtype is not None:
        e_t = jnp.tanh(pre.astype(tanh_dtype)).astype(jnp.float32)
    else:
        e_t = jnp.tanh(pre)                                 # (Bt*Np, A)

    # combined_fc (out_features = 1) as elementwise mul + lane reduction, keeping the
    # scores lane-dense: (Bt, Np) with Np on the lane axis.
    e_t3 = e_t.reshape(bt, n_pad, a_dim)                    # expand leading dims (free)
    wc3 = wc_ref[...].reshape(1, 1, a_dim)
    scores = jnp.sum(e_t3 * wc3, axis=-1) + bc_ref[0, 0]    # (Bt, Np)

    # Mask padded positions before the softmax (padded feature rows are zero, but their
    # scores would otherwise contaminate the denominator).
    if n_pad != n_valid:
        lane = jax.lax.broadcasted_iota(jnp.int32, (bt, n_pad), 1)
        scores = jnp.where(lane < n_valid, scores, -1e30)

    # softmax over Np (lane axis)
    m = jnp.max(scores, axis=-1, keepdims=True)
    p = jnp.exp(scores - m)
    denom = jnp.sum(p, axis=-1, keepdims=True)
    alpha = p * pl.reciprocal(denom, approx=False)          # (Bt, Np)

    # context_vector[b] = sum_n alpha[b, n] * features[b, n, :] as one MXU matmul:
    # block-diagonal (Bt, Bt*Np) alpha (precomputed mask) against (Bt*Np, E).
    tiled = jnp.concatenate([alpha] * bt, axis=1) if bt > 1 else alpha  # (Bt, Bt*Np)
    alpha_bd = tiled * bdmask_ref[...]                      # (Bt, Bt*Np)
    # alpha is quantized to the matmul dtype here (bf16 path: ~2^-9 relative error in
    # ctx; accepted and documented — keeps the contraction at full MXU rate).
    ctx = jnp.dot(alpha_bd.astype(feat2.dtype), feat2,
                  preferred_element_type=jnp.float32)       # (Bt, E)

    ctx_ref[...] = ctx.astype(ctx_ref.dtype)
    alpha_ref[...] = alpha.astype(alpha_ref.dtype)


def attention_forward(features, hidden, params, *, batch_tile=None,
                      matmul_dtype=jnp.bfloat16, tanh_dtype=None, pad_n_to=None):
    """features: (B, N, E), hidden: (B, D).
    Returns (context_vector (B, E) f32, alpha (B, N, 1) f32).

    batch_tile: batch elements per grid step (must divide B). Default: 8 when possible,
      so the grid has many steps (pipelining + v7x megacore) and the broadcast side
      matmuls stay << features_fc.
    matmul_dtype: dtype for the MXU matmul inputs (default bf16; f32 accumulation,
      tanh/softmax stay f32). Pass jnp.float32 for a bit-tight path.
    tanh_dtype: optional dtype for the tanh transcendental (e.g. jnp.bfloat16 on
      v6e/v7x). Leave None on v5e (no bf16 EUP).
    pad_n_to: pad N up to a multiple of this. Default: the dtype sublane pack (8 f32 /
      16 bf16) so reshapes stay free; use 128 at production N for lane-dense alpha vst.
    """
    B, N, E = features.shape
    D = hidden.shape[1]
    wf, bf, wh, bh, wc, bc = params
    A = wf.shape[1]

    mm_dtype = jnp.dtype(jnp.float32 if matmul_dtype is None else matmul_dtype)

    # Batch tile: cap at 8 so side matmuls stay O(bt) small and the grid has >= 2 steps
    # whenever B >= 16 (both v7x TensorCores get work). Tiny/odd batches -> one step.
    if batch_tile is None:
        bt = 8 if (B > 8 and B % 8 == 0) else B
    else:
        bt = batch_tile
    assert B % bt == 0, "batch_tile must divide the batch size"
    grid = (B // bt,)

    # Pad N so the (bt, Np, E) -> (bt*Np, E) collapse is a free layout change.
    if pad_n_to is None:
        pad_n_to = 8 * (4 // mm_dtype.itemsize)             # 8 for f32, 16 for bf16
    n_pad = ((N + pad_n_to - 1) // pad_n_to) * pad_n_to
    if n_pad != N:
        features = jnp.pad(features, ((0, 0), (0, n_pad - N), (0, 0)))

    features = features.astype(mm_dtype)
    hidden = hidden.astype(mm_dtype)
    wf_c = wf.astype(mm_dtype)
    wh_c = wh.astype(mm_dtype)
    bh_tot = (bf + bh).astype(jnp.float32)     # fold features_fc bias into hidden path
    wc_c = wc.astype(jnp.float32)
    bc_c = bc.astype(jnp.float32)

    # Hoisted grid-invariant constants: one-hot expansion (Bt*Np, Bt) and the
    # block-diagonal mask (Bt, Bt*Np). Built once here, constant index_map below.
    r = jnp.arange(bt * n_pad, dtype=jnp.int32)[:, None]
    c = jnp.arange(bt, dtype=jnp.int32)[None, :]
    expand = (r // n_pad == c).astype(jnp.float32)           # (Bt*Np, Bt)
    row = jnp.arange(bt, dtype=jnp.int32)[:, None]
    col = jnp.arange(bt * n_pad, dtype=jnp.int32)[None, :]
    bd_mask = (col // n_pad == row).astype(jnp.float32)      # (Bt, Bt*Np)

    # VMEM budget (explicit so the same tile fits v7x's 64 MiB physical VMEM).
    itemsize = mm_dtype.itemsize
    feat_blk = bt * n_pad * E * itemsize
    hid_blk = bt * D * itemsize
    weights = (E * A + D * A) * itemsize + (3 * A + 1) * 4
    masks = 2 * bt * bt * n_pad * 4
    outs = bt * (E + n_pad) * 4
    interm = 4 * bt * n_pad * A * 4                          # a2/h_big/e_t/p f32 temps
    vmem_est = 2 * (feat_blk + hid_blk + outs) + weights + masks + interm
    vmem_limit = int(min(max(2 * vmem_est, 8 * 1024 * 1024), 64 * 1024 * 1024))

    def const_spec(shape):
        # Grid-invariant input: constant index_map, single-buffered (no wasted VMEM).
        return pl.BlockSpec(shape, lambda i: (0,) * len(shape),
                            pipeline_mode=pl.Buffered(1))

    kernel_fn = functools.partial(attention_kernel, n_valid=N, tanh_dtype=tanh_dtype)

    kernel = pl.pallas_call(
        kernel_fn,
        out_shape=(
            jax.ShapeDtypeStruct((B, E), jnp.float32),
            jax.ShapeDtypeStruct((B, n_pad), jnp.float32),   # lane-dense alpha
        ),
        grid_spec=pltpu.PrefetchScalarGridSpec(
            num_scalar_prefetch=0,
            grid=grid,
            in_specs=[
                pl.BlockSpec((bt, n_pad, E), lambda i: (i, 0, 0)),   # features
                pl.BlockSpec((bt, D), lambda i: (i, 0)),             # hidden
                const_spec((E, A)),                                  # W_features (in, out)
                const_spec((D, A)),                                  # W_hidden (in, out)
                const_spec((1, A)),                                  # b_hidden + b_features
                const_spec((1, A)),                                  # W_combined (as row)
                pl.BlockSpec(memory_space=pltpu.MemorySpace.SMEM),   # b_combined scalar
                const_spec((bt * n_pad, bt)),                        # one-hot expand
                const_spec((bt, bt * n_pad)),                        # block-diag mask
            ],
            out_specs=[
                pl.BlockSpec((bt, E), lambda i: (i, 0)),             # context vector
                pl.BlockSpec((bt, n_pad), lambda i: (i, 0)),         # alpha, lane-dense
            ],
        ),
        compiler_params=pltpu.CompilerParams(
            dimension_semantics=("parallel",),
            vmem_limit_bytes=vmem_limit),
    )
    ctx, alpha = kernel(features, hidden, wf_c, wh_c, bh_tot, wc_c, bc_c,
                        expand, bd_mask)
    # Drop N padding and restore the PyTorch-matching (B, N, 1) alpha layout.
    return ctx, alpha[:, :N][..., None]


def init_params(key, encoder_dim, decoder_dim, attention_dim):
    """Deterministic synthetic params matching nn.Linear shapes (stored transposed)."""
    k = jax.random.split(key, 6)

    def unif(kk, shape, fan_in):
        bound = 1.0 / jnp.sqrt(fan_in)
        return jax.random.uniform(kk, shape, jnp.float32, -bound, bound)

    wf = unif(k[0], (encoder_dim, attention_dim), encoder_dim)
    bf = unif(k[1], (1, attention_dim), encoder_dim)
    wh = unif(k[2], (decoder_dim, attention_dim), decoder_dim)
    bh = unif(k[3], (1, attention_dim), decoder_dim)
    wc = unif(k[4], (1, attention_dim), attention_dim)   # combined_fc weight (out=1)
    bc = unif(k[5], (1, 1), attention_dim)
    return wf, bf, wh, bh, wc, bc


def reference_forward(features, hidden, params):
    wf, bf, wh, bh, wc, bc = params
    a = features @ wf + bf                                  # (B, N, A)
    h_t = (hidden @ wh + bh)[:, None, :]                    # (B, 1, A)
    e_t = jnp.tanh(a + h_t)                                 # (B, N, A)
    full = jnp.sum(e_t * wc[None], axis=-1, keepdims=True) + bc[None]   # (B, N, 1)
    alpha = jax.nn.softmax(full, axis=1)
    ctx = jnp.sum(features * alpha, axis=1)
    return ctx, alpha


if __name__ == "__main__":
    B, N = 2, 8          # batch, number of encoder feature locations
    encoder_dim, decoder_dim, attention_dim = 32, 32, 32

    key = jax.random.PRNGKey(0)
    kf, kh, kp = jax.random.split(key, 3)
    features = jax.random.normal(kf, (B, N, encoder_dim), jnp.float32)
    hidden = jax.random.normal(kh, (B, decoder_dim), jnp.float32)
    params = init_params(kp, encoder_dim, decoder_dim, attention_dim)

    ctx_expected, alpha_expected = reference_forward(features, hidden, params)

    # float32 path (tight check, no N padding at these shapes).
    ctx, alpha = attention_forward(features, hidden, params,
                                   matmul_dtype=jnp.float32)
    ctx = jax.block_until_ready(ctx)
    alpha = jax.block_until_ready(alpha)
    assert ctx.shape == (B, encoder_dim) and alpha.shape == (B, N, 1)
    assert jnp.allclose(ctx, ctx_expected, atol=3e-5, rtol=3e-5)
    assert jnp.allclose(alpha, alpha_expected, atol=3e-5, rtol=3e-5)

    # Default bf16 matmul-input path (f32 accumulation); also exercises the padded-N
    # masked-softmax path (N=8 -> 16 for bf16). Loose check.
    ctx16, alpha16 = attention_forward(features, hidden, params)
    ctx16 = jax.block_until_ready(ctx16)
    alpha16 = jax.block_until_ready(alpha16)
    assert ctx16.shape == (B, encoder_dim) and alpha16.shape == (B, N, 1)
    assert jnp.allclose(ctx16, ctx_expected, atol=5e-2, rtol=5e-2)
    assert jnp.allclose(alpha16, alpha_expected, atol=5e-2, rtol=5e-2)

    print("KERNEL_OK")
</pallas_src>

<mosaic_0001>
module attributes {stable_mosaic.version = 11 : i64} {
  func.func @attention_kernel(%arg0: i32, %arg1: memref<2x8x32xf32, #tpu.memory_space<vmem>>, %arg2: memref<2x32xf32, #tpu.memory_space<vmem>>, %arg3: memref<32x32xf32, #tpu.memory_space<vmem>>, %arg4: memref<32x32xf32, #tpu.memory_space<vmem>>, %arg5: memref<1x32xf32, #tpu.memory_space<vmem>>, %arg6: memref<1x32xf32, #tpu.memory_space<vmem>>, %arg7: memref<1x1xf32, #tpu.memory_space<smem>>, %arg8: memref<16x2xf32, #tpu.memory_space<vmem>>, %arg9: memref<2x16xf32, #tpu.memory_space<vmem>>, %arg10: memref<2x32xf32, #tpu.memory_space<vmem>>, %arg11: memref<2x8xf32, #tpu.memory_space<vmem>>) attributes {dimension_semantics = [#tpu.dimension_semantics<parallel>], iteration_bounds = array<i64: 1>, scalar_prefetch = 0 : i64, scratch_operands = 0 : i64, tpu.core_type = #tpu.core_type<tc>, window_params = [{transform_indices = @transform_0, window_bounds = array<i64: 2, 8, 32>}, {transform_indices = @transform_1, window_bounds = array<i64: 2, 32>}, {pipeline_mode = #tpu.pipeline_mode<synchronous>, transform_indices = @transform_2, window_bounds = array<i64: 32, 32>}, {pipeline_mode = #tpu.pipeline_mode<synchronous>, transform_indices = @transform_3, window_bounds = array<i64: 32, 32>}, {pipeline_mode = #tpu.pipeline_mode<synchronous>, transform_indices = @transform_4, window_bounds = array<i64: 1, 32>}, {pipeline_mode = #tpu.pipeline_mode<synchronous>, transform_indices = @transform_5, window_bounds = array<i64: 1, 32>}, {transform_indices = @transform_6, window_bounds = array<i64: 1, 1>}, {pipeline_mode = #tpu.pipeline_mode<synchronous>, transform_indices = @transform_7, window_bounds = array<i64: 16, 2>}, {pipeline_mode = #tpu.pipeline_mode<synchronous>, transform_indices = @transform_8, window_bounds = array<i64: 2, 16>}, {transform_indices = @transform_9, window_bounds = array<i64: 2, 32>}, {transform_indices = @transform_10, window_bounds = array<i64: 2, 8>}]} {
    %c0 = arith.constant 0 : index
    %c0_0 = arith.constant 0 : index
    %c0_1 = arith.constant 0 : index
    %0 = vector.load %arg1[%c0, %c0_0, %c0_1] : memref<2x8x32xf32, #tpu.memory_space<vmem>>, vector<2x8x32xf32>
    %1 = vector.shape_cast %0 : vector<2x8x32xf32> to vector<16x32xf32>
    %c0_2 = arith.constant 0 : index
    %c0_3 = arith.constant 0 : index
    %2 = vector.load %arg3[%c0_2, %c0_3] : memref<32x32xf32, #tpu.memory_space<vmem>>, vector<32x32xf32>
    %cst = arith.constant dense<0.000000e+00> : vector<16x32xf32>
    %3 = tpu.matmul %1, %2, %cst {dimension_numbers = #tpu.dot_dimension_numbers<[1], [0], [0], [1], [0, 0, 1, 1], [], []>} : vector<16x32xf32>, vector<32x32xf32>, vector<16x32xf32> -> vector<16x32xf32>
    %c0_4 = arith.constant 0 : index
    %c0_5 = arith.constant 0 : index
    %4 = vector.load %arg2[%c0_4, %c0_5] : memref<2x32xf32, #tpu.memory_space<vmem>>, vector<2x32xf32>
    %c0_6 = arith.constant 0 : index
    %c0_7 = arith.constant 0 : index
    %5 = vector.load %arg4[%c0_6, %c0_7] : memref<32x32xf32, #tpu.memory_space<vmem>>, vector<32x32xf32>
    %cst_8 = arith.constant dense<0.000000e+00> : vector<2x32xf32>
    %6 = tpu.matmul %4, %5, %cst_8 {dimension_numbers = #tpu.dot_dimension_numbers<[1], [0], [0], [1], [0, 0, 1, 1], [], []>} : vector<2x32xf32>, vector<32x32xf32>, vector<2x32xf32> -> vector<2x32xf32>
    %c0_9 = arith.constant 0 : index
    %c0_10 = arith.constant 0 : index
    %7 = vector.load %arg5[%c0_9, %c0_10] : memref<1x32xf32, #tpu.memory_space<vmem>>, vector<1x32xf32>
    %8 = vector.broadcast %7 : vector<1x32xf32> to vector<2x32xf32>
    %9 = arith.addf %6, %8 : vector<2x32xf32>
    %c0_11 = arith.constant 0 : index
    %c0_12 = arith.constant 0 : index
    %10 = vector.load %arg8[%c0_11, %c0_12] : memref<16x2xf32, #tpu.memory_space<vmem>>, vector<16x2xf32>
    %cst_13 = arith.constant dense<0.000000e+00> : vector<16x32xf32>
    %11 = tpu.matmul %10, %9, %cst_13 {dimension_numbers = #tpu.dot_dimension_numbers<[1], [0], [0], [1], [0, 0, 1, 1], [], []>} : vector<16x2xf32>, vector<2x32xf32>, vector<16x32xf32> -> vector<16x32xf32>
    %12 = arith.addf %3, %11 : vector<16x32xf32>
    %13 = math.tanh %12 : vector<16x32xf32>
    %14 = vector.shape_cast %13 : vector<16x32xf32> to vector<2x8x32xf32>
    %c0_14 = arith.constant 0 : index
    %c0_15 = arith.constant 0 : index
    %15 = vector.load %arg6[%c0_14, %c0_15] : memref<1x32xf32, #tpu.memory_space<vmem>>, vector<1x32xf32>
    %16 = vector.shape_cast %15 : vector<1x32xf32> to vector<1x1x32xf32>
    %17 = vector.broadcast %16 : vector<1x1x32xf32> to vector<2x8x32xf32>
    %18 = arith.mulf %14, %17 : vector<2x8x32xf32>
    %cst_16 = arith.constant dense<0.000000e+00> : vector<2x8xf32>
    %19 = vector.multi_reduction <add>, %18, %cst_16 [2] : vector<2x8x32xf32> to vector<2x8xf32>
    %c0_17 = arith.constant 0 : index
    %c0_18 = arith.constant 0 : index
    %20 = memref.load %arg7[%c0_17, %c0_18] : memref<1x1xf32, #tpu.memory_space<smem>>
    %21 = vector.broadcast %20 : f32 to vector<2x8xf32>
    %22 = arith.addf %19, %21 : vector<2x8xf32>
    %cst_19 = arith.constant dense<0xFF800000> : vector<2xf32>
    %23 = vector.multi_reduction <maximumf>, %22, %cst_19 [1] : vector<2x8xf32> to vector<2xf32>
    %24 = vector.shape_cast %23 : vector<2xf32> to vector<2x1xf32>
    %25 = vector.broadcast %24 : vector<2x1xf32> to vector<2x8xf32>
    %26 = arith.subf %22, %25 : vector<2x8xf32>
    %27 = math.exp %26 : vector<2x8xf32>
    %cst_20 = arith.constant dense<0.000000e+00> : vector<2xf32>
    %28 = vector.multi_reduction <add>, %27, %cst_20 [1] : vector<2x8xf32> to vector<2xf32>
    %29 = vector.shape_cast %28 : vector<2xf32> to vector<2x1xf32>
    %30 = tpu.reciprocal %29 : vector<2x1xf32> -> vector<2x1xf32>
    %31 = vector.broadcast %30 : vector<2x1xf32> to vector<2x8xf32>
    %32 = arith.mulf %27, %31 : vector<2x8xf32>
    %33 = tpu.concatenate %32, %32 in 1 : vector<2x8xf32>, vector<2x8xf32> -> vector<2x16xf32>
    %c0_21 = arith.constant 0 : index
    %c0_22 = arith.constant 0 : index
    %34 = vector.load %arg9[%c0_21, %c0_22] : memref<2x16xf32, #tpu.memory_space<vmem>>, vector<2x16xf32>
    %35 = arith.mulf %33, %34 : vector<2x16xf32>
    %cst_23 = arith.constant dense<0.000000e+00> : vector<2x32xf32>
    %36 = tpu.matmul %35, %1, %cst_23 {dimension_numbers = #tpu.dot_dimension_numbers<[1], [0], [0], [1], [0, 0, 1, 1], [], []>} : vector<2x16xf32>, vector<16x32xf32>, vector<2x32xf32> -> vector<2x32xf32>
    %c0_24 = arith.constant 0 : index
    %c0_25 = arith.constant 0 : index
    %37 = vector.load %arg10[%c0_24, %c0_25] : memref<2x32xf32, #tpu.memory_space<vmem>>, vector<2x32xf32>
    tpu.vector_store %arg10[%c0_24, %c0_25], %36 {strides = array<i32>} : memref<2x32xf32, #tpu.memory_space<vmem>>, vector<2x32xf32>,
    %c0_26 = arith.constant 0 : index
    %c0_27 = arith.constant 0 : index
    %38 = vector.load %arg11[%c0_26, %c0_27] : memref<2x8xf32, #tpu.memory_space<vmem>>, vector<2x8xf32>
    tpu.vector_store %arg11[%c0_26, %c0_27], %32 {strides = array<i32>} : memref<2x8xf32, #tpu.memory_space<vmem>>, vector<2x8xf32>,
    return
  }
  func.func @transform_0(%arg0: i32) -> (i32, i32, i32) {
    %c0_i32 = arith.constant 0 : i32
    %c0_i32_0 = arith.constant 0 : i32
    %c0_i32_1 = arith.constant 0 : i32
    return %arg0, %c0_i32, %c0_i32_0 : i32, i32, i32
  }
  func.func @transform_1(%arg0: i32) -> (i32, i32) {
    %c0_i32 = arith.constant 0 : i32
    %c0_i32_0 = arith.constant 0 : i32
    return %arg0, %c0_i32 : i32, i32
  }
  func.func @transform_2(%arg0: i32) -> (i32, i32) {
    %c0_i32 = arith.constant 0 : i32
    %c0_i32_0 = arith.constant 0 : i32
    %c0_i32_1 = arith.constant 0 : i32
    return %c0_i32, %c0_i32_0 : i32, i32
  }
  func.func @transform_3(%arg0: i32) -> (i32, i32) {
    %c0_i32 = arith.constant 0 : i32
    %c0_i32_0 = arith.constant 0 : i32
    %c0_i32_1 = arith.constant 0 : i32
    return %c0_i32, %c0_i32_0 : i32, i32
  }
  func.func @transform_4(%arg0: i32) -> (i32, i32) {
    %c0_i32 = arith.constant 0 : i32
    %c0_i32_0 = arith.constant 0 : i32
    %c0_i32_1 = arith.constant 0 : i32
    return %c0_i32, %c0_i32_0 : i32, i32
  }
  func.func @transform_5(%arg0: i32) -> (i32, i32) {
    %c0_i32 = arith.constant 0 : i32
    %c0_i32_0 = arith.constant 0 : i32
    %c0_i32_1 = arith.constant 0 : i32
    return %c0_i32, %c0_i32_0 : i32, i32
  }
  func.func @transform_6(%arg0: i32) -> (i32, i32) {
    %c0_i32 = arith.constant 0 : i32
    %c0_i32_0 = arith.constant 0 : i32
    %c0_i32_1 = arith.constant 0 : i32
    return %c0_i32, %c0_i32_0 : i32, i32
  }
  func.func @transform_7(%arg0: i32) -> (i32, i32) {
    %c0_i32 = arith.constant 0 : i32
    %c0_i32_0 = arith.constant 0 : i32
    %c0_i32_1 = arith.constant 0 : i32
    return %c0_i32, %c0_i32_0 : i32, i32
  }
  func.func @transform_8(%arg0: i32) -> (i32, i32) {
    %c0_i32 = arith.constant 0 : i32
    %c0_i32_0 = arith.constant 0 : i32
    %c0_i32_1 = arith.constant 0 : i32
    return %c0_i32, %c0_i32_0 : i32, i32
  }
  func.func @transform_9(%arg0: i32) -> (i32, i32) {
    %c0_i32 = arith.constant 0 : i32
    %c0_i32_0 = arith.constant 0 : i32
    return %arg0, %c0_i32 : i32, i32
  }
  func.func @transform_10(%arg0: i32) -> (i32, i32) {
    %c0_i32 = arith.constant 0 : i32
    %c0_i32_0 = arith.constant 0 : i32
    return %arg0, %c0_i32 : i32, i32
  }
}

</mosaic_0001>

<llo_original>
// kernel: tpu_custom_call.1
$region0: #{tpu_custom_call.1}
  #allocation0 [shape = 'u32[]', space=smem, size = 0x4, offset = 0x4, fixed_abs, tag = 'smem constant byte address 0x4 - core index']
  #allocation1 [shape = 'u32[144,128]{1,0:T(1,128)}', space=vmem, size = 0x12000, scoped, tag = 'internal scratch']
  #allocation2 [shape = 'f32[1,1]{1,0:T(1,128)S(6)}', space=smem, size = 0x200, scoped, tag = 'scoped memory for tpu_custom_call.1']
  %s0 = inlined_call_operand.vmem [shape: f32[2,8,32], index: 0, kind: input, shape index: {}]
  %s1 = inlined_call_operand.vmem [shape: f32[2,32], index: 1, kind: input, shape index: {}]
  %s2 = inlined_call_operand.hbm [shape: f32[32,32], index: 2, kind: input, shape index: {}]
  %s3 = inlined_call_operand.hbm [shape: f32[32,32], index: 3, kind: input, shape index: {}]
  %s4 = inlined_call_operand.vmem [shape: f32[1,32], index: 4, kind: input, shape index: {}]
  %s5 = inlined_call_operand.vmem [shape: f32[1,32], index: 5, kind: input, shape index: {}]
  %s6 = inlined_call_operand.<no memory space> [shape: f32[1,1], index: 6, kind: input, shape index: {}]
  %s7 = inlined_call_operand.vmem [shape: f32[16,2], index: 7, kind: input, shape index: {}]
  %s8 = inlined_call_operand.vmem [shape: f32[2,16], index: 8, kind: input, shape index: {}]
  %s9 = inlined_call_operand.hbm [shape: f32[2,32], index: 9, kind: output, shape index: {0}]
  %s10 = inlined_call_operand.hbm [shape: f32[2,8], index: 10, kind: output, shape index: {1}]
  %11 = xla_tuple %s9, %s10
  %s12 = sld [smem:[#allocation0]]
  $region62: #{tpu_custom_call.1} parent=0
    _
  %s14 = ssub.s32 1, %s12
  %s15 = scalar_select 0, %s14, %s12
  %16 = sst [smem:[#allocation2]] %s6
  $region1: #{tpu_custom_call.1} parent=0
    #allocation3 [shape = 'u8[16384]{0}', space=vmem, size = 0x4000, scoped, tag = 'input window, operand 2, single buffered']
    #allocation4 [shape = 's32[1]{0}', space=sflag, size = 0x4, scoped, tag = 'scoped memory for tpu_custom_call.1']
    #allocation5 [shape = 's32[1]{0}', space=sflag, size = 0x4, scoped, tag = 'scoped memory for tpu_custom_call.1']
    #allocation6 [shape = 'u8[16384]{0}', space=vmem, size = 0x4000, scoped, tag = 'input window, operand 3, single buffered']
    #allocation7 [shape = 's32[1]{0}', space=sflag, size = 0x4, scoped, tag = 'scoped memory for tpu_custom_call.1']
    #allocation8 [shape = 'u8[1024]{0}', space=vmem, size = 0x400, scoped, tag = 'output window, operand 0, single buffered']
    #allocation9 [shape = 'u8[1024]{0}', space=vmem, size = 0x400, scoped, tag = 'output window, operand 1, single buffered']
    #allocation10 [shape = 's32[1]{0}', space=sflag, size = 0x4, scoped, tag = 'scoped memory for tpu_custom_call.1']
    %17 = vsyncpa [#allocation4], 0
    %18 = vsyncpa [#allocation7], 0
    %19 = vsyncpa [#allocation5], 0
    %20 = vsyncpa [#allocation10], 0
    // Predicated region
    $region2: #{tpu_custom_call.1} parent=1 // pred_check
      _
    $region3: #{tpu_custom_call.1} parent=1 // pred_check_branch
      %22 = sbr.rel (0) target = $region5
    $region4: #{tpu_custom_call.1} parent=1 // pred_region
      _
    $region5: #{tpu_custom_call.1} parent=1 // pred_fallthru
      _
    // Predicated region
    $region6: #{tpu_custom_call.1} parent=1 // pred_check
      _
    $region7: #{tpu_custom_call.1} parent=1 // pred_check_branch
      %24 = sbr.rel (0) target = $region9
    $region8: #{tpu_custom_call.1} parent=1 // pred_region
      _
    $region9: #{tpu_custom_call.1} parent=1 // pred_fallthru
      _
    // Predicated region
    $region10: #{tpu_custom_call.1} parent=1 // pred_check
      _
    $region11: #{tpu_custom_call.1} parent=1 // pred_check_branch
      %26 = sbr.rel (0) target = $region13
    $region12: #{tpu_custom_call.1} parent=1 // pred_region
      %s28 = ssub.s32 512, 512
      %29 = vsyncadd [#allocation4], %s28
      %s30 = sshll.u32 [#allocation3], 4
      %s31 = int_to_ptr.vmem [resolvable:$true] %s30
      %36 = dma.hbm_to_vmem [thread:$0]  %s2, 512, %s31, [#allocation4], 128, 128, 8
    $region13: #{tpu_custom_call.1} parent=1 // pred_fallthru
      _
    // Predicated region
    $region14: #{tpu_custom_call.1} parent=1 // pred_check
      _
    $region15: #{tpu_custom_call.1} parent=1 // pred_check_branch
      %38 = sbr.rel (0) target = $region17
    $region16: #{tpu_custom_call.1} parent=1 // pred_region
      %s40 = ssub.s32 512, 512
      %41 = vsyncadd [#allocation7], %s40
      %s42 = sshll.u32 [#allocation6], 4
      %s43 = int_to_ptr.vmem [resolvable:$true] %s42
      %48 = dma.hbm_to_vmem [thread:$0]  %s3, 512, %s43, [#allocation7], 128, 128, 8
    $region17: #{tpu_custom_call.1} parent=1 // pred_fallthru
      _
    // Predicated region
    $region18: #{tpu_custom_call.1} parent=1 // pred_check
      _
    $region19: #{tpu_custom_call.1} parent=1 // pred_check_branch
      %50 = sbr.rel (0) target = $region21
    $region20: #{tpu_custom_call.1} parent=1 // pred_region
      _
    $region21: #{tpu_custom_call.1} parent=1 // pred_fallthru
      _
    // Predicated region
    $region22: #{tpu_custom_call.1} parent=1 // pred_check
      _
    $region23: #{tpu_custom_call.1} parent=1 // pred_check_branch
      %52 = sbr.rel (0) target = $region25
    $region24: #{tpu_custom_call.1} parent=1 // pred_region
      _
    $region25: #{tpu_custom_call.1} parent=1 // pred_fallthru
      _
    // Predicated region
    $region26: #{tpu_custom_call.1} parent=1 // pred_check
      _
    $region27: #{tpu_custom_call.1} parent=1 // pred_check_branch
      %54 = sbr.rel (0) target = $region29
    $region28: #{tpu_custom_call.1} parent=1 // pred_region
      _
    $region29: #{tpu_custom_call.1} parent=1 // pred_fallthru
      _
    // Predicated region
    $region30: #{tpu_custom_call.1} parent=1 // pred_check
      _
    $region31: #{tpu_custom_call.1} parent=1 // pred_check_branch
      %56 = sbr.rel (0) target = $region33
    $region32: #{tpu_custom_call.1} parent=1 // pred_region
      _
    $region33: #{tpu_custom_call.1} parent=1 // pred_fallthru
      _
    // Predicated region
    $region34: #{tpu_custom_call.1} parent=1 // pred_check
      _
    $region35: #{tpu_custom_call.1} parent=1 // pred_check_branch
      %58 = sbr.rel (0) target = $region37
    $region36: #{tpu_custom_call.1} parent=1 // pred_region
      _
    $region37: #{tpu_custom_call.1} parent=1 // pred_fallthru
      _
    // Predicated region
    $region38: #{tpu_custom_call.1} parent=1 // pred_check
      _
    $region39: #{tpu_custom_call.1} parent=1 // pred_check_branch
      %60 = sbr.rel (0) target = $region41
    $region40: #{tpu_custom_call.1} parent=1 // pred_region
      %61 = dma.done [#allocation4], 512
    $region41: #{tpu_custom_call.1} parent=1 // pred_fallthru
      _
    // Predicated region
    $region42: #{tpu_custom_call.1} parent=1 // pred_check
      _
    $region43: #{tpu_custom_call.1} parent=1 // pred_check_branch
      %63 = sbr.rel (0) target = $region45
    $region44: #{tpu_custom_call.1} parent=1 // pred_region
      %64 = dma.done [#allocation7], 512
    $region45: #{tpu_custom_call.1} parent=1 // pred_fallthru
      _
    %v65 = vld [vmem:[%s0] sm:$0xff]
    %v66 = vld [vmem:[%s0 + $0x8] sm:$0xff]
    %v67 = vld [vmem:[#allocation3] sm:$0xff]
    %v68 = vld [vmem:[#allocation3 + $0x8] sm:$0xff]
    %v69 = vld [vmem:[#allocation3 + $0x10] sm:$0xff]
    %v70 = vld [vmem:[#allocation3 + $0x18] sm:$0xff]
    %v71 = vld [vmem:[%s1] sm:$0x3]
    %v72 = vld [vmem:[#allocation6] sm:$0xff]
    %v73 = vld [vmem:[#allocation6 + $0x8] sm:$0xff]
    %v74 = vld [vmem:[#allocation6 + $0x10] sm:$0xff]
    %v75 = vld [vmem:[#allocation6 + $0x18] sm:$0xff]
    %v76 = vld [vmem:[%s4] sm:$0x1]
    %v78 = vlaneseq
    %v79 = vshrl.u32 %v78, 7
    %v80 = vsub.s32 0, %v79
    %v81 = vrot.slane %v76, %v80
    %vm83 = vcmask 261120
    %v85 = vsel %vm83, %v71, 0
    %87 = vmatprep.subr.mxu0 0.0
    %88 = vmatpush1.msra.mxu0 0.0
    %89 = vmatprep.subr.mxu0 0.0
    %90 = vmatpush1.msra.mxu0 0.0
    %91 = vmatprep.subr.mxu0 0.0
    %92 = vmatpush1.msra.mxu0 0.0
    %93 = vmatprep.subr.mxu0 0.0
    %94 = vmatpush1.msra.mxu0 0.0
    %95 = vmatprep.subr.mxu0 0.0
    %96 = vmatpush1.msra.mxu0 0.0
    %97 = vmatprep.subr.mxu0 0.0
    %98 = vmatpush1.msra.mxu0 0.0
    %99 = vmatprep.subr.mxu0 0.0
    %100 = vmatpush1.msra.mxu0 0.0
    %101 = vmatprep.subr.mxu0 0.0
    %102 = vmatpush1.msra.mxu0 0.0
    %103 = vmatprep.subr.mxu0 0.0
    %104 = vmatpush1.msra.mxu0 0.0
    %105 = vmatprep.subr.mxu0 0.0
    %106 = vmatpush1.msra.mxu0 0.0
    %107 = vmatprep.subr.mxu0 0.0
    %108 = vmatpush1.msra.mxu0 0.0
    %109 = vmatprep.subr.mxu0 0.0
    %110 = vmatpush1.msra.mxu0 0.0
    %111 = vmatprep.subr.mxu0 0.0
    %112 = vmatpush1.msra.mxu0 %v75
    %113 = vmatprep.subr.mxu0 0.0
    %114 = vmatpush1.msra.mxu0 %v74
    %115 = vmatprep.subr.mxu0 0.0
    %116 = vmatpush1.msra.mxu0 %v73
    %117 = vmatprep.subr.mxu0 0.0
    %118 = vmatpush1.msra.mxu0 %v72
    %119 = vmatprep.subr.mxu0 0.0
    %120 = vmatpush2.msra.mxu0 0.0
    %121 = vmatprep.subr.mxu0 0.0
    %122 = vmatpush2.msra.mxu0 0.0
    %123 = vmatprep.subr.mxu0 0.0
    %124 = vmatpush2.msra.mxu0 0.0
    %125 = vmatprep.subr.mxu0 0.0
    %126 = vmatpush2.msra.mxu0 0.0
    %127 = vmatprep.subr.mxu0 0.0
    %128 = vmatpush2.msra.mxu0 0.0
    %129 = vmatprep.subr.mxu0 0.0
    %130 = vmatpush2.msra.mxu0 0.0
    %131 = vmatprep.subr.mxu0 0.0
    %132 = vmatpush2.msra.mxu0 0.0
    %133 = vmatprep.subr.mxu0 0.0
    %134 = vmatpush2.msra.mxu0 0.0
    %135 = vmatprep.subr.mxu0 0.0
    %136 = vmatpush2.msra.mxu0 0.0
    %137 = vmatprep.subr.mxu0 0.0
    %138 = vmatpush2.msra.mxu0 0.0
    %139 = vmatprep.subr.mxu0 0.0
    %140 = vmatpush2.msra.mxu0 0.0
    %141 = vmatprep.subr.mxu0 0.0
    %142 = vmatpush2.msra.mxu0 0.0
    %143 = vmatprep.subr.mxu0 0.0
    %144 = vmatpush2.msra.mxu0 0.0
    %145 = vmatprep.subr.mxu0 0.0
    %146 = vmatpush2.msra.mxu0 0.0
    %147 = vmatprep.subr.mxu0 0.0
    %148 = vmatpush2.msra.mxu0 0.0
    %149 = vmatprep.subr.mxu0 0.0
    %150 = vmatpush2.msra.mxu0 0.0
    %151 = vmatprep.mubr.f32.mxu0 0.0
    %152 = vmatmul.mubr.f32.gmra.mxu0 %v85
    %v153 = vpop.f32.mrf.mxu0
    %v154 = vadd.f32 %v81, %v153
    %v155 = vpop.f32.mrf.mxu0
    %156 = vdwg.mxu0
    %v157 = vld [vmem:[%s7] sm:$0xff]
    %v158 = vld [vmem:[%s7 + $0x8] sm:$0xff]
    %vm159 = vcmask 15360
    %v161 = vsel %vm159, %v157, 0
    %v164 = vsel %vm159, %v158, 0
    %vm166 = vcmask 1041408
    %v168 = vsel %vm166, %v154, 0
    %170 = vmatprep.subr.mxu0 0.0
    %171 = vmatpush1.msra.mxu0 0.0
    %172 = vmatprep.subr.mxu0 0.0
    %173 = vmatpush1.msra.mxu0 0.0
    %174 = vmatprep.subr.mxu0 0.0
    %175 = vmatpush1.msra.mxu0 0.0
    %176 = vmatprep.subr.mxu0 0.0
    %177 = vmatpush1.msra.mxu0 0.0
    %178 = vmatprep.subr.mxu0 0.0
    %179 = vmatpush1.msra.mxu0 0.0
    %180 = vmatprep.subr.mxu0 0.0
    %181 = vmatpush1.msra.mxu0 0.0
    %182 = vmatprep.subr.mxu0 0.0
    %183 = vmatpush1.msra.mxu0 0.0
    %184 = vmatprep.subr.mxu0 0.0
    %185 = vmatpush1.msra.mxu0 0.0
    %186 = vmatprep.subr.mxu0 0.0
    %187 = vmatpush1.msra.mxu0 0.0
    %188 = vmatprep.subr.mxu0 0.0
    %189 = vmatpush1.msra.mxu0 0.0
    %190 = vmatprep.subr.mxu0 0.0
    %191 = vmatpush1.msra.mxu0 0.0
    %192 = vmatprep.subr.mxu0 0.0
    %193 = vmatpush1.msra.mxu0 0.0
    %194 = vmatprep.subr.mxu0 0.0
    %195 = vmatpush1.msra.mxu0 0.0
    %196 = vmatprep.subr.mxu0 0.0
    %197 = vmatpush1.msra.mxu0 0.0
    %198 = vmatprep.subr.mxu0 0.0
    %199 = vmatpush1.msra.mxu0 0.0
    %200 = vmatprep.subr.mxu0 0.0
    %201 = vmatpush1.msra.mxu0 %v168
    %202 = vmatprep.subr.mxu0 0.0
    %203 = vmatpush2.msra.mxu0 0.0
    %204 = vmatprep.subr.mxu0 0.0
    %205 = vmatpush2.msra.mxu0 0.0
    %206 = vmatprep.subr.mxu0 0.0
    %207 = vmatpush2.msra.mxu0 0.0
    %208 = vmatprep.subr.mxu0 0.0
    %209 = vmatpush2.msra.mxu0 0.0
    %210 = vmatprep.subr.mxu0 0.0
    %211 = vmatpush2.msra.mxu0 0.0
    %212 = vmatprep.subr.mxu0 0.0
    %213 = vmatpush2.msra.mxu0 0.0
    %214 = vmatprep.subr.mxu0 0.0
    %215 = vmatpush2.msra.mxu0 0.0
    %216 = vmatprep.subr.mxu0 0.0
    %217 = vmatpush2.msra.mxu0 0.0
    %218 = vmatprep.subr.mxu0 0.0
    %219 = vmatpush2.msra.mxu0 0.0
    %220 = vmatprep.subr.mxu0 0.0
    %221 = vmatpush2.msra.mxu0 0.0
    %222 = vmatprep.subr.mxu0 0.0
    %223 = vmatpush2.msra.mxu0 0.0
    %224 = vmatprep.subr.mxu0 0.0
    %225 = vmatpush2.msra.mxu0 0.0
    %226 = vmatprep.subr.mxu0 0.0
    %227 = vmatpush2.msra.mxu0 0.0
    %228 = vmatprep.subr.mxu0 0.0
    %229 = vmatpush2.msra.mxu0 0.0
    %230 = vmatprep.subr.mxu0 0.0
    %231 = vmatpush2.msra.mxu0 0.0
    %232 = vmatprep.subr.mxu0 0.0
    %233 = vmatpush2.msra.mxu0 0.0
    %234 = vmatprep.mubr.f32.mxu0 0.0
    %235 = vmatmul.mubr.f32.gmra.mxu0 %v161
    %v236 = vpop.f32.mrf.mxu0
    %v237 = vadd.f32 0.0, %v236
    %v238 = vpop.f32.mrf.mxu0
    %239 = vmatprep.mubr.f32.mxu0 0.0
    %240 = vmatmul.mubr.f32.gmra.mxu0 %v164
    %v241 = vpop.f32.mrf.mxu0
    %v242 = vadd.f32 0.0, %v241
    %v243 = vpop.f32.mrf.mxu0
    %244 = vdwg.mxu0
    %v246 = vsel %vm83, %v65, 0
    %v249 = vsel %vm83, %v66, 0
    %251 = vmatprep.subr.mxu0 0.0
    %252 = vmatpush1.msra.mxu0 0.0
    %253 = vmatprep.subr.mxu0 0.0
    %254 = vmatpush1.msra.mxu0 0.0
    %255 = vmatprep.subr.mxu0 0.0
    %256 = vmatpush1.msra.mxu0 0.0
    %257 = vmatprep.subr.mxu0 0.0
    %258 = vmatpush1.msra.mxu0 0.0
    %259 = vmatprep.subr.mxu0 0.0
    %260 = vmatpush1.msra.mxu0 0.0
    %261 = vmatprep.subr.mxu0 0.0
    %262 = vmatpush1.msra.mxu0 0.0
    %263 = vmatprep.subr.mxu0 0.0
    %264 = vmatpush1.msra.mxu0 0.0
    %265 = vmatprep.subr.mxu0 0.0
    %266 = vmatpush1.msra.mxu0 0.0
    %267 = vmatprep.subr.mxu0 0.0
    %268 = vmatpush1.msra.mxu0 0.0
    %269 = vmatprep.subr.mxu0 0.0
    %270 = vmatpush1.msra.mxu0 0.0
    %271 = vmatprep.subr.mxu0 0.0
    %272 = vmatpush1.msra.mxu0 0.0
    %273 = vmatprep.subr.mxu0 0.0
    %274 = vmatpush1.msra.mxu0 0.0
    %275 = vmatprep.subr.mxu0 0.0
    %276 = vmatpush1.msra.mxu0 %v70
    %277 = vmatprep.subr.mxu0 0.0
    %278 = vmatpush1.msra.mxu0 %v69
    %279 = vmatprep.subr.mxu0 0.0
    %280 = vmatpush1.msra.mxu0 %v68
    %281 = vmatprep.subr.mxu0 0.0
    %282 = vmatpush1.msra.mxu0 %v67
    %283 = vmatprep.subr.mxu0 0.0
    %284 = vmatpush2.msra.mxu0 0.0
    %285 = vmatprep.subr.mxu0 0.0
    %286 = vmatpush2.msra.mxu0 0.0
    %287 = vmatprep.subr.mxu0 0.0
    %288 = vmatpush2.msra.mxu0 0.0
    %289 = vmatprep.subr.mxu0 0.0
    %290 = vmatpush2.msra.mxu0 0.0
    %291 = vmatprep.subr.mxu0 0.0
    %292 = vmatpush2.msra.mxu0 0.0
    %293 = vmatprep.subr.mxu0 0.0
    %294 = vmatpush2.msra.mxu0 0.0
    %295 = vmatprep.subr.mxu0 0.0
    %296 = vmatpush2.msra.mxu0 0.0
    %297 = vmatprep.subr.mxu0 0.0
    %298 = vmatpush2.msra.mxu0 0.0
    %299 = vmatprep.subr.mxu0 0.0
    %300 = vmatpush2.msra.mxu0 0.0
    %301 = vmatprep.subr.mxu0 0.0
    %302 = vmatpush2.msra.mxu0 0.0
    %303 = vmatprep.subr.mxu0 0.0
    %304 = vmatpush2.msra.mxu0 0.0
    %305 = vmatprep.subr.mxu0 0.0
    %306 = vmatpush2.msra.mxu0 0.0
    %307 = vmatprep.subr.mxu0 0.0
    %308 = vmatpush2.msra.mxu0 0.0
    %309 = vmatprep.subr.mxu0 0.0
    %310 = vmatpush2.msra.mxu0 0.0
    %311 = vmatprep.subr.mxu0 0.0
    %312 = vmatpush2.msra.mxu0 0.0
    %313 = vmatprep.subr.mxu0 0.0
    %314 = vmatpush2.msra.mxu0 0.0
    %315 = vmatprep.mubr.f32.mxu0 0.0
    %316 = vmatmul.mubr.f32.gmra.mxu0 %v246
    %v317 = vpop.f32.mrf.mxu0
    %v318 = vadd.f32 %v237, %v317
    %v319 = vpop.f32.mrf.mxu0
    %320 = vmatprep.mubr.f32.mxu0 0.0
    %321 = vmatmul.mubr.f32.gmra.mxu0 %v249
    %v322 = vpop.f32.mrf.mxu0
    %v323 = vadd.f32 %v242, %v322
    %v324 = vpop.f32.mrf.mxu0
    %325 = vdwg.mxu0
    %v326 = vtanh.pop %v318
    %v327 = vtanh.pop %v323
    %v328 = vld [vmem:[%s5] sm:$0x1]
    %v330 = vlaneseq
    %v331 = vshrl.u32 %v330, 7
    %v332 = vsub.s32 0, %v331
    %v333 = vrot.slane %v328, %v332
    %v335 = vmul.f32 %v326, %v333
    %v336 = vmul.f32 %v327, %v333
    %v337 = vsel %vm83, %v335, 0.0
    %338 = vadd.xlane.f32.xlu0 %v337
    %v339 = vpop.xlane.xlu0 %338
    %v340 = vsel %vm83, %v336, 0.0
    %341 = vadd.xlane.f32.xlu0 %v340
    %v342 = vpop.xlane.xlu0 %341
    %s343 = sld [smem:[#allocation2]]
    %v344 = vstv %s343
    %v345 = vadd.f32 %v339, %v344
    %v346 = vadd.f32 %v342, %v344
    %v349 = vlaneseq
    %v350 = vand.u32 %v349, 127
    %v351 = vlaneseq
    %v352 = vshrl.u32 %v351, 7
    %v353 = vsub.s32 %v350, %v352
    %v354 = vrot.slane %v345, %v353
    %v355 = vlaneseq
    %v356 = vshrl.u32 %v355, 7
    %v357 = vsub.s32 %v350, %v356
    %v358 = vrot.slane %v346, %v357
    %vm359 = vcmask 1041409
    %v360 = vsel %vm359, %v358, %v354
    %vm362 = vcmask 58368
    %v363 = vsel %vm362, %v360, -inf
    %364 = vmax.xlane.f32.xlu0 %v363
    %v365 = vpop.xlane.xlu0 %364
    %v367 = vlaneseq
    %v368 = vshrl.u32 %v367, 7
    %v369 = vsub.s32 0, %v368
    %v370 = vrot.slane %v365, %v369
    %v371 = vlaneseq
    %v372 = vshrl.u32 %v371, 7
    %v373 = vsub.s32 1, %v372
    %v374 = vrot.slane %v365, %v373
    %v377 = vsub.f32 %v345, %v370
    %v378 = vsub.f32 %v346, %v374
    %v379 = vmul.f32 %v377, 1.442695
    %v380 = vpow.pop %v379
    %v381 = vmul.f32 %v378, 1.442695
    %v382 = vpow.pop %v381
    %385 = vset.pattern.permute.xlu0 0
    %386 = vperm.xlu0 %385, %v380
    %v387 = vpop.permute.xlu0 %386
    %388 = vset.pattern.permute.xlu0 0
    %389 = vperm.xlu0 %388, %v382
    %v390 = vpop.permute.xlu0 %389
    %v391 = vlaneseq
    %v392 = vshrl.u32 %v391, 7
    %v393 = vsub.s32 %v350, %v392
    %v394 = vrot.slane %v387, %v393
    %v395 = vlaneseq
    %v396 = vshrl.u32 %v395, 7
    %v397 = vsub.s32 %v350, %v396
    %v398 = vrot.slane %v390, %v397
    %v399 = vsel %vm359, %v398, %v394
    %v401 = vsel %vm362, %v399, 0.0
    %402 = vadd.xlane.f32.xlu0 %v401
    %v403 = vpop.xlane.xlu0 %402
    %v404 = vrcp.pop %v403
    %v406 = vlaneseq
    %v407 = vshrl.u32 %v406, 7
    %v408 = vsub.s32 0, %v407
    %v409 = vrot.slane %v404, %v408
    %v410 = vlaneseq
    %v411 = vshrl.u32 %v410, 7
    %v412 = vsub.s32 1, %v411
    %v413 = vrot.slane %v404, %v412
    %v416 = vmul.f32 %v380, %v409
    %v417 = vmul.f32 %v382, %v413
    %420 = vset.pattern.permute.xlu0 0
    %421 = vperm.xlu0 %420, %v416
    %v422 = vpop.permute.xlu0 %421
    %423 = vset.pattern.permute.xlu0 0
    %424 = vperm.xlu0 %423, %v417
    %v425 = vpop.permute.xlu0 %424
    %v426 = vlaneseq
    %v427 = vshrl.u32 %v426, 7
    %v428 = vsub.s32 %v350, %v427
    %v429 = vrot.slane %v422, %v428
    %v430 = vlaneseq
    %v431 = vshrl.u32 %v430, 7
    %v432 = vsub.s32 %v350, %v431
    %v433 = vrot.slane %v425, %v432
    %v434 = vsel %vm359, %v433, %v429
    %v436 = vadd.s32 %v350, 4294967288
    %v437 = vlaneseq
    %v438 = vshrl.u32 %v437, 7
    %v439 = vsub.s32 %v436, %v438
    %v440 = vrot.slane %v422, %v439
    %v441 = vlaneseq
    %v442 = vshrl.u32 %v441, 7
    %v443 = vsub.s32 %v436, %v442
    %v444 = vrot.slane %v425, %v443
    %v445 = vsel %vm359, %v444, %v440
    %vm447 = vcmask 64512
    %v448 = vsel %vm447, %v434, %v445
    %v449 = vld [vmem:[%s8] sm:$0x3]
    %v450 = vmul.f32 %v448, %v449
    %vm451 = vcmask 130048
    %v453 = vsel %vm451, %v450, 0
    %455 = vmatprep.subr.mxu0 0.0
    %456 = vmatpush1.msra.mxu0 0.0
    %457 = vmatprep.subr.mxu0 0.0
    %458 = vmatpush1.msra.mxu0 0.0
    %459 = vmatprep.subr.mxu0 0.0
    %460 = vmatpush1.msra.mxu0 0.0
    %461 = vmatprep.subr.mxu0 0.0
    %462 = vmatpush1.msra.mxu0 0.0
    %463 = vmatprep.subr.mxu0 0.0
    %464 = vmatpush1.msra.mxu0 0.0
    %465 = vmatprep.subr.mxu0 0.0
    %466 = vmatpush1.msra.mxu0 0.0
    %467 = vmatprep.subr.mxu0 0.0
    %468 = vmatpush1.msra.mxu0 0.0
    %469 = vmatprep.subr.mxu0 0.0
    %470 = vmatpush1.msra.mxu0 0.0
    %471 = vmatprep.subr.mxu0 0.0
    %472 = vmatpush1.msra.mxu0 0.0
    %473 = vmatprep.subr.mxu0 0.0
    %474 = vmatpush1.msra.mxu0 0.0
    %475 = vmatprep.subr.mxu0 0.0
    %476 = vmatpush1.msra.mxu0 0.0
    %477 = vmatprep.subr.mxu0 0.0
    %478 = vmatpush1.msra.mxu0 0.0
    %479 = vmatprep.subr.mxu0 0.0
    %480 = vmatpush1.msra.mxu0 0.0
    %481 = vmatprep.subr.mxu0 0.0
    %482 = vmatpush1.msra.mxu0 0.0
    %483 = vmatprep.subr.mxu0 0.0
    %484 = vmatpush1.msra.mxu0 %v66
    %485 = vmatprep.subr.mxu0 0.0
    %486 = vmatpush1.msra.mxu0 %v65
    %487 = vmatprep.subr.mxu0 0.0
    %488 = vmatpush2.msra.mxu0 0.0
    %489 = vmatprep.subr.mxu0 0.0
    %490 = vmatpush2.msra.mxu0 0.0
    %491 = vmatprep.subr.mxu0 0.0
    %492 = vmatpush2.msra.mxu0 0.0
    %493 = vmatprep.subr.mxu0 0.0
    %494 = vmatpush2.msra.mxu0 0.0
    %495 = vmatprep.subr.mxu0 0.0
    %496 = vmatpush2.msra.mxu0 0.0
    %497 = vmatprep.subr.mxu0 0.0
    %498 = vmatpush2.msra.mxu0 0.0
    %499 = vmatprep.subr.mxu0 0.0
    %500 = vmatpush2.msra.mxu0 0.0
    %501 = vmatprep.subr.mxu0 0.0
    %502 = vmatpush2.msra.mxu0 0.0
    %503 = vmatprep.subr.mxu0 0.0
    %504 = vmatpush2.msra.mxu0 0.0
    %505 = vmatprep.subr.mxu0 0.0
    %506 = vmatpush2.msra.mxu0 0.0
    %507 = vmatprep.subr.mxu0 0.0
    %508 = vmatpush2.msra.mxu0 0.0
    %509 = vmatprep.subr.mxu0 0.0
    %510 = vmatpush2.msra.mxu0 0.0
    %511 = vmatprep.subr.mxu0 0.0
    %512 = vmatpush2.msra.mxu0 0.0
    %513 = vmatprep.subr.mxu0 0.0
    %514 = vmatpush2.msra.mxu0 0.0
    %515 = vmatprep.subr.mxu0 0.0
    %516 = vmatpush2.msra.mxu0 0.0
    %517 = vmatprep.subr.mxu0 0.0
    %518 = vmatpush2.msra.mxu0 0.0
    %519 = vmatprep.mubr.f32.mxu0 0.0
    %520 = vmatmul.mubr.f32.gmra.mxu0 %v453
    %v521 = vpop.f32.mrf.mxu0
    %v522 = vadd.f32 0.0, %v521
    %v523 = vpop.f32.mrf.mxu0
    %524 = vdwg.mxu0
    %vm525 = vcmask 254976
    %526 = vst.msk [vmem:[#allocation8] sm:$0x3] %vm525, %v522
    %527 = vst.msk [vmem:[#allocation9] sm:$0x3] %vm362, %v434
    // Predicated region
    $region46: #{tpu_custom_call.1} parent=1 // pred_check
      _
    $region47: #{tpu_custom_call.1} parent=1 // pred_check_branch
      %529 = sbr.rel (0) target = $region49
    $region48: #{tpu_custom_call.1} parent=1 // pred_region
      %s531 = ssub.s32 32, 32
      %532 = vsyncadd [#allocation5], %s531
      %s534 = sshll.u32 [#allocation8], 4
      %s535 = int_to_ptr.vmem [resolvable:$true] %s534
      %537 = dma.vmem_to_hbm [thread:$0]  %s535, 32, %s9, [#allocation5]
    $region49: #{tpu_custom_call.1} parent=1 // pred_fallthru
      _
    // Predicated region
    $region50: #{tpu_custom_call.1} parent=1 // pred_check
      _
    $region51: #{tpu_custom_call.1} parent=1 // pred_check_branch
      %539 = sbr.rel (0) target = $region53
    $region52: #{tpu_custom_call.1} parent=1 // pred_region
      %s541 = ssub.s32 32, 32
      %542 = vsyncadd [#allocation10], %s541
      %s544 = sshll.u32 [#allocation9], 4
      %s545 = int_to_ptr.vmem [resolvable:$true] %s544
      %547 = dma.vmem_to_hbm [thread:$0]  %s545, 32, %s10, [#allocation10]
    $region53: #{tpu_custom_call.1} parent=1 // pred_fallthru
      _
    // Predicated region
    $region54: #{tpu_custom_call.1} parent=1 // pred_check
      _
    $region55: #{tpu_custom_call.1} parent=1 // pred_check_branch
      %549 = sbr.rel (0) target = $region57
    $region56: #{tpu_custom_call.1} parent=1 // pred_region
      %550 = dma.done [#allocation5], 32
    $region57: #{tpu_custom_call.1} parent=1 // pred_fallthru
      _
    // Predicated region
    $region58: #{tpu_custom_call.1} parent=1 // pred_check
      _
    $region59: #{tpu_custom_call.1} parent=1 // pred_check_branch
      %552 = sbr.rel (0) target = $region61
    $region60: #{tpu_custom_call.1} parent=1 // pred_region
      %553 = dma.done [#allocation10], 32
    $region61: #{tpu_custom_call.1} parent=1 // pred_fallthru
      _
    %554 = vsyncpa [#allocation4], 1
    %555 = vsyncpa [#allocation7], 1
    %556 = vsyncpa [#allocation5], 1
    %557 = vsyncpa [#allocation10], 1

</llo_original>
